<compile_context>
chip_gen: v7x
topology: tpu7x:2x2x1
jax: 0.10.0
libtpu: 0.0.40
codegen_flags: <defaults>
</compile_context>

<pallas_src>
import math
from functools import partial

import jax
import jax.numpy as jnp
from jax.experimental import pallas as pl
from jax.experimental.pallas import tpu as pltpu


def _round_up(x, m):
    return ((x + m - 1) // m) * m


def gat_kernel(adj_ref, rhs_ref, out_ref, acc_ref, *, feat, approx_recip):
    """One (row-tile, k-tile) step of the fused attention aggregation.

    adj_ref : (TM, TK) int8       streamed 0/1 adjacency-pattern tile
    rhs_ref : (TK, Fp) bf16/f32   [w*x | w | 0-pad] rows for this k tile
    out_ref : (TM, Fp) f32        lane-dense output row tile, written at last k
    acc_ref : (TM, Fp) f32        VMEM accumulator, persists across the k axis
    """
    k = pl.program_id(1)

    @pl.when(k == 0)
    def _():
        acc_ref[...] = jnp.zeros_like(acc_ref)

    # int8 0/1 -> compute dtype on the VPU (hidden under the adj DMA), then a
    # single fused MXU matmul yields both the weighted-feature sums and the
    # softmax denominator (column `feat` of the accumulator).
    pat = adj_ref[...].astype(rhs_ref.dtype)
    acc_ref[...] += jnp.dot(pat, rhs_ref[...], preferred_element_type=jnp.float32)

    @pl.when(k == pl.num_programs(1) - 1)
    def _():
        acc = acc_ref[...]                           # (TM, Fp) f32
        s = acc[:, feat:feat + 1]                    # row sum == softmax denominator
        # Rows with an empty pattern: s == 0 and acc == 0 -> output 0, matching
        # torch.sparse.softmax + torch.sparse.mm on rows with no stored entries.
        denom = jnp.where(s > 0, s, jnp.float32(1.0))
        inv = pl.reciprocal(denom, approx=approx_recip)    # EUP, not VALU divide
        out_ref[...] = (acc * inv).astype(out_ref.dtype)   # lane-dense store


def graph_attention_layer(x, a, adj, *, block_rows=256, block_cols=512,
                          agg_dtype=jnp.bfloat16, adj_pat=None):
    """x: (N,F) f32, a: (F,1) f32, adj: (N,N) dense adjacency (pattern = adj != 0).

    agg_dtype : dtype of the [w*x | w] RHS and of the MXU matmul (bf16 fast
                path, jnp.float32 for an exact path).  The adjacency pattern is
                always streamed as int8 (exact) and upcast in-kernel.
    adj_pat   : optional pre-built (N,N) int8 0/1 pattern; pass it to amortize
                the N^2 conversion across layer calls / training steps.
    """
    n, f = x.shape
    agg_dtype = jnp.dtype(agg_dtype)

    # ---- Hoisted per-node work (O(N*F), plain XLA, runs once) ---------------
    e = jnp.sum(x.astype(jnp.float32) * a.reshape(1, f).astype(jnp.float32), axis=1)
    # Global-max shift: algebraically exact because the logit is row-independent.
    # TODO(synk): rows whose neighbors all sit ~88+ below the global max
    #             underflow to an all-zero row, unlike a per-row-max softmax.
    w = jnp.exp(e - jnp.max(e))                                     # (N,)
    rhs = jnp.concatenate([x * w[:, None], w[:, None]], axis=1)     # (N, F+1)
    fp = _round_up(f + 1, 128)                       # lane-dense RHS / output
    if fp > f + 1:
        rhs = jnp.pad(rhs, ((0, 0), (0, fp - (f + 1))))
    rhs = rhs.astype(agg_dtype)

    # ---- Stored sparsity pattern, int8 (cacheable across calls) -------------
    if adj_pat is None:
        # TODO(synk): torch's adj is a sparse COO tensor; explicitly-stored
        #             zeros are dropped by this dense reconstruction.  Cache
        #             adj_pat across forward calls to amortize this N^2 pass.
        adj_pat = (adj != 0).astype(jnp.int8)

    # ---- Tile sizes (int8 sublane packing = 32 rows, 128 lanes) -------------
    row_align, col_align = 32, 128
    block_rows = min(block_rows, n)
    block_cols = min(block_cols, n)
    if block_rows < n:
        # Keep the requested number of row tiles but minimize padding.
        nt = pl.cdiv(n, block_rows)
        block_rows = _round_up(pl.cdiv(n, nt), row_align)
    elif n >= 2 * row_align:
        # One tile would cover the whole graph: split rows in two so both v7x
        # TensorCores / megacore halves get work.
        block_rows = _round_up(pl.cdiv(n, 2), row_align)
    if block_cols < n:
        nt = pl.cdiv(n, block_cols)
        block_cols = _round_up(pl.cdiv(n, nt), col_align)

    # Zero-pad so tiles divide evenly (pad rows -> s == 0 -> zero output rows;
    # pad cols hit zero RHS rows -> contribute nothing; sliced off below).
    n_r = _round_up(n, block_rows)
    n_c = _round_up(n, block_cols)
    if (n_r, n_c) != (n, n):
        adj_pat = jnp.pad(adj_pat, ((0, n_r - n), (0, n_c - n)))
    if n_c != n:
        rhs = jnp.pad(rhs, ((0, n_c - n), (0, 0)))

    grid = (n_r // block_rows, n_c // block_cols)

    # VMEM budget: double-buffered streamed tiles + accumulator (independent of
    # N thanks to K-tiling).  Capped so it also fits v7x's 64 MiB per TC.
    est = (2 * block_rows * block_cols                       # int8 adj tiles
           + 2 * block_cols * fp * agg_dtype.itemsize        # rhs tiles
           + 2 * block_rows * fp * 4                         # out tiles
           + block_rows * fp * 4                             # accumulator
           + (2 << 20))
    vmem_limit = int(min(48 << 20, max(16 << 20, est)))

    kernel = partial(gat_kernel, feat=f,
                     approx_recip=(agg_dtype != jnp.dtype(jnp.float32)))

    out = pl.pallas_call(
        kernel,
        out_shape=jax.ShapeDtypeStruct((n_r, fp), jnp.float32),
        grid=grid,
        in_specs=[
            pl.BlockSpec((block_rows, block_cols), lambda i, k: (i, k)),  # adj tile
            pl.BlockSpec((block_cols, fp), lambda i, k: (k, 0)),          # rhs k tile
        ],
        out_specs=pl.BlockSpec((block_rows, fp), lambda i, k: (i, 0)),
        scratch_shapes=[pltpu.VMEM((block_rows, fp), jnp.float32)],
        compiler_params=pltpu.CompilerParams(
            dimension_semantics=("parallel", "arbitrary"),
            vmem_limit_bytes=vmem_limit,
        ),
        cost_estimate=pl.CostEstimate(
            flops=2 * n_r * n_c * fp,
            transcendentals=n_r,
            bytes_accessed=n_r * n_c                       # int8 adjacency stream
                           + n_c * fp * agg_dtype.itemsize
                           + n_r * fp * 4,
        ),
    )(adj_pat, rhs)

    return out[:n, :f]


def _reference(x, a, adj):
    """Dense re-statement of the PyTorch forward (sparse softmax over the pattern)."""
    e = jnp.sum(x * a.reshape(1, -1), axis=1)
    mask = adj != 0
    logits = jnp.where(mask, e[None, :], -1e30)
    m = logits.max(axis=1, keepdims=True)
    p = jnp.where(mask, jnp.exp(logits - m), 0.0)
    s = p.sum(axis=1, keepdims=True)
    attn = p / jnp.where(s > 0, s, 1.0)
    return jnp.matmul(attn, x, precision=jax.lax.Precision.HIGHEST)


if __name__ == "__main__":
    N = 256          # nodes_num
    FEAT = 32        # feature_size (embedding_size)

    key = jax.random.PRNGKey(0)
    k_x, k_a, k_adj = jax.random.split(key, 3)

    # Node features.
    x = jax.random.normal(k_x, (N, FEAT), dtype=jnp.float32)

    # Parameter `a`: (feature_size, 1), xavier_uniform_ with gain=1.414.
    gain = 1.414
    bound = gain * math.sqrt(6.0 / (FEAT + 1))
    a = jax.random.uniform(k_a, (FEAT, 1), dtype=jnp.float32,
                           minval=-bound, maxval=bound)

    # Dense 0/1 adjacency (sparsity pattern) with self-loops; zero one row to
    # exercise the empty-pattern (all-zero output) path of sparse softmax.
    adj = jax.random.bernoulli(k_adj, 0.1, (N, N)).astype(jnp.float32)
    adj = jnp.maximum(adj, jnp.eye(N, dtype=jnp.float32))
    adj = adj.at[5, :].set(0.0)

    # Fast path: int8 adjacency stream + bf16 fused matmul; 128x128 tiles give
    # a 2x2 grid that exercises both the parallel row axis and the k-reduction
    # accumulator.
    h_fast = graph_attention_layer(x, a, adj, block_rows=128, block_cols=128)
    jax.block_until_ready(h_fast)

    # Exact path: same kernel with an f32 RHS / f32 MXU accumulate — verifies
    # the softmax factoring / normalize-after-aggregation math.
    h_exact = graph_attention_layer(x, a, adj, block_rows=128, block_cols=128,
                                    agg_dtype=jnp.float32)
    jax.block_until_ready(h_exact)

    ref = _reference(x, a, adj)
    assert h_fast.shape == (N, FEAT)
    assert jnp.allclose(h_exact, ref, atol=2e-5, rtol=2e-5), \
        float(jnp.max(jnp.abs(h_exact - ref)))
    # bf16 RHS ([w*x | w]) introduces ~0.2-0.4% relative error; the int8
    # adjacency pattern itself is exact.
    assert jnp.allclose(h_fast, ref, atol=3e-2, rtol=3e-2), \
        float(jnp.max(jnp.abs(h_fast - ref)))

    print("KERNEL_OK")
</pallas_src>

<mosaic_0001>
module attributes {stable_mosaic.version = 11 : i64} {
  func.func @gat_kernel(%arg0: i32, %arg1: i32, %arg2: memref<128x128xi8, #tpu.memory_space<vmem>>, %arg3: memref<128x128xbf16, #tpu.memory_space<vmem>>, %arg4: memref<128x128xf32, #tpu.memory_space<vmem>>, %arg5: memref<128x128xf32, #tpu.memory_space<vmem>>) attributes {dimension_semantics = [#tpu.dimension_semantics<parallel>, #tpu.dimension_semantics<arbitrary>], iteration_bounds = array<i64: 2, 2>, scalar_prefetch = 0 : i64, scratch_operands = 1 : i64, tpu.core_type = #tpu.core_type<tc>, window_params = [{transform_indices = @transform_0, window_bounds = array<i64: 128, 128>}, {transform_indices = @transform_1, window_bounds = array<i64: 128, 128>}, {transform_indices = @transform_2, window_bounds = array<i64: 128, 128>}]} {
    %c0_i32 = arith.constant 0 : i32
    %0 = arith.cmpi eq, %arg1, %c0_i32 : i32
    %1 = arith.extui %0 : i1 to i32
    %c0_i32_0 = arith.constant 0 : i32
    %2 = arith.cmpi ne, %1, %c0_i32_0 : i32
    scf.if %2 {
      %cst_9 = arith.constant 0.000000e+00 : f32
      %13 = vector.broadcast %cst_9 : f32 to vector<128x128xf32>
      %c0_10 = arith.constant 0 : index
      %c0_11 = arith.constant 0 : index
      %14 = vector.load %arg5[%c0_10, %c0_11] : memref<128x128xf32, #tpu.memory_space<vmem>>, vector<128x128xf32>
      tpu.vector_store %arg5[%c0_10, %c0_11], %13 {strides = array<i32>} : memref<128x128xf32, #tpu.memory_space<vmem>>, vector<128x128xf32>,
    } else {
    }
    %c0 = arith.constant 0 : index
    %c0_1 = arith.constant 0 : index
    %3 = vector.load %arg2[%c0, %c0_1] : memref<128x128xi8, #tpu.memory_space<vmem>>, vector<128x128xi8>
    %4 = arith.sitofp %3 : vector<128x128xi8> to vector<128x128xbf16>
    %c0_2 = arith.constant 0 : index
    %c0_3 = arith.constant 0 : index
    %5 = vector.load %arg5[%c0_2, %c0_3] : memref<128x128xf32, #tpu.memory_space<vmem>>, vector<128x128xf32>
    %c0_4 = arith.constant 0 : index
    %c0_5 = arith.constant 0 : index
    %6 = vector.load %arg3[%c0_4, %c0_5] : memref<128x128xbf16, #tpu.memory_space<vmem>>, vector<128x128xbf16>
    %cst = arith.constant dense<0.000000e+00> : vector<128x128xf32>
    %7 = tpu.matmul %4, %6, %cst {dimension_numbers = #tpu.dot_dimension_numbers<[1], [0], [0], [1], [0, 0, 1, 1], [], []>} : vector<128x128xbf16>, vector<128x128xbf16>, vector<128x128xf32> -> vector<128x128xf32>
    %8 = arith.addf %5, %7 : vector<128x128xf32>
    %c0_6 = arith.constant 0 : index
    %c0_7 = arith.constant 0 : index
    %9 = vector.load %arg5[%c0_6, %c0_7] : memref<128x128xf32, #tpu.memory_space<vmem>>, vector<128x128xf32>
    tpu.vector_store %arg5[%c0_6, %c0_7], %8 {strides = array<i32>} : memref<128x128xf32, #tpu.memory_space<vmem>>, vector<128x128xf32>,
    %c1_i32 = arith.constant 1 : i32
    %10 = arith.cmpi eq, %arg1, %c1_i32 : i32
    %11 = arith.extui %10 : i1 to i32
    %c0_i32_8 = arith.constant 0 : i32
    %12 = arith.cmpi ne, %11, %c0_i32_8 : i32
    scf.if %12 {
      %c0_9 = arith.constant 0 : index
      %c0_10 = arith.constant 0 : index
      %13 = vector.load %arg5[%c0_9, %c0_10] : memref<128x128xf32, #tpu.memory_space<vmem>>, vector<128x128xf32>
      %14 = vector.extract_strided_slice %13 {offsets = [0, 32], sizes = [128, 1], strides = [1, 1]} : vector<128x128xf32> to vector<128x1xf32>
      %cst_11 = arith.constant 0.000000e+00 : f32
      %15 = vector.broadcast %cst_11 : f32 to vector<128x1xf32>
      %16 = arith.cmpf ogt, %14, %15 : vector<128x1xf32>
      %cst_12 = arith.constant 1.000000e+00 : f32
      %17 = vector.broadcast %cst_12 : f32 to vector<128x1xf32>
      %18 = arith.select %16, %14, %17 : vector<128x1xi1>, vector<128x1xf32>
      %19 = tpu.reciprocal %18 {approx = true} : vector<128x1xf32> -> vector<128x1xf32>
      %20 = vector.broadcast %19 : vector<128x1xf32> to vector<128x128xf32>
      %21 = arith.mulf %13, %20 : vector<128x128xf32>
      %c0_13 = arith.constant 0 : index
      %c0_14 = arith.constant 0 : index
      %22 = vector.load %arg4[%c0_13, %c0_14] : memref<128x128xf32, #tpu.memory_space<vmem>>, vector<128x128xf32>
      tpu.vector_store %arg4[%c0_13, %c0_14], %21 {strides = array<i32>} : memref<128x128xf32, #tpu.memory_space<vmem>>, vector<128x128xf32>,
    } else {
    }
    return
  }
  func.func @transform_0(%arg0: i32, %arg1: i32) -> (i32, i32) {
    %c0_i32 = arith.constant 0 : i32
    return %arg0, %arg1 : i32, i32
  }
  func.func @transform_1(%arg0: i32, %arg1: i32) -> (i32, i32) {
    %c0_i32 = arith.constant 0 : i32
    %c0_i32_0 = arith.constant 0 : i32
    return %arg1, %c0_i32 : i32, i32
  }
  func.func @transform_2(%arg0: i32, %arg1: i32) -> (i32, i32) {
    %c0_i32 = arith.constant 0 : i32
    %c0_i32_0 = arith.constant 0 : i32
    return %arg0, %c0_i32 : i32, i32
  }
}

</mosaic_0001>

<llo_original>
// kernel: tpu_custom_call.1
$region0: #{tpu_custom_call.1}
  #allocation0 [shape = 'u32[]', space=smem, size = 0x4, offset = 0x4, fixed_abs, tag = 'smem constant byte address 0x4 - core index']
  #allocation1 [shape = 'u32[144,128]{1,0:T(1,128)}', space=vmem, size = 0x12000, scoped, tag = 'internal scratch']
  #allocation2 [shape = 'f32[128,128]{1,0:T(8,128)}', space=vmem, size = 0x10000, scoped, tag = 'scratch operand']
  %s0 = inlined_call_operand.hbm [shape: s8[256,256], index: 0, kind: input, shape index: {}]
  %s1 = inlined_call_operand.hbm [shape: bf16[256,128], index: 1, kind: input, shape index: {}]
  %s2 = inlined_call_operand.hbm [shape: f32[256,128], index: 2, kind: output, shape index: {}]
  %s3 = sld [smem:[#allocation0]]
  $region57: #{tpu_custom_call.1} parent=0
    _
  %s5 = ssub.s32 1, %s3
  %s6 = scalar_select 0, %s5, %s3
  $region1: #{tpu_custom_call.1} parent=0
    #allocation3 [shape = 'u8[32768]{0}', space=vmem, size = 0x8000, scoped, tag = 'input window, operand 0']
    #allocation4 [shape = 's32[2]{0}', space=sflag, size = 0x8, scoped, tag = 'scoped memory for tpu_custom_call.1']
    #allocation5 [shape = 's32[2]{0}', space=sflag, size = 0x8, scoped, tag = 'scoped memory for tpu_custom_call.1']
    #allocation6 [shape = 'u8[65536]{0}', space=vmem, size = 0x10000, scoped, tag = 'input window, operand 1']
    #allocation7 [shape = 's32[2]{0}', space=sflag, size = 0x8, scoped, tag = 'scoped memory for tpu_custom_call.1']
    #allocation8 [shape = 'u8[131072]{0}', space=vmem, size = 0x20000, scoped, tag = 'output window, operand 0']
    %7 = vsyncpa [#allocation4], 0
    %s8 = scalar_lea.sflag [#allocation4], 1
    %9 = vsyncpa %s8, 0
    %10 = vsyncpa [#allocation7], 0
    %s11 = scalar_lea.sflag [#allocation7], 1
    %12 = vsyncpa %s11, 0
    %13 = vsyncpa [#allocation5], 0
    %s14 = scalar_lea.sflag [#allocation5], 1
    %15 = vsyncpa %s14, 0
    loop: start=0, step=1, limit=6
    $region2: #{tpu_custom_call.1} parent=1 // loop_pre_header
      _
    $region3: #{tpu_custom_call.1} parent=1 // loop_header
      %s17 = sphi 0, %s21
      %p18 = scmp.ge.s32.totalorder %s17, 6
      %s24 = sphi 0, %s36
      %s25 = sphi 0, %s32
      %s26 = sphi 0, %s24
      %s27 = sphi 0, %s25
      %s28 = sphi 0, %s26
      %s29 = sphi 0, %s27
      %s41 = sphi 0, %s43
      %s44 = sphi 0, %s41
      %s45 = sphi 0, %s44
      %s61 = sphi 0, %s45
      %s67 = sphi 0, %s69
      %s70 = sphi 0, %s67
      %s71 = sphi 0, %s70
      %s87 = sphi 0, %s71
      %s93 = sphi 0, %s95
      %s96 = sphi 0, %s93
      %s97 = sphi 0, %s96
      %s113 = sphi 0, %s97
    $region4: #{tpu_custom_call.1} parent=1 // loop_header_branch
      %20 = sbr.rel (%p18) target = $region8
    $region5: #{tpu_custom_call.1} parent=1 // loop_body
      %s22 = ssub.s32 %s17, 1
      %s23 = ssub.s32 %s17, 2
      %s30 = sadd.s32 1, %s25
      %p31 = scmp.ge.s32.totalorder %s30, 2
      %s32 = scalar_select %p31, 0, %s30
      %s33 = sadd.s32 1, %s24
      %s34 = scalar_select %p31, %s33, %s24
      %p35 = scmp.ge.s32.totalorder %s34, 2
      %s36 = scalar_select %p35, 0, %s34
      %s37 = ssub.s32 %s24, %s36
      %s38 = ssub.s32 %s25, %s32
      %s39 = sor.u32 %s37, %s38
      %p40 = scmp.eq.s32.totalorder %s39, 0
      %s42 = sadd.s32 %s41, 1
      %s43 = scalar_select %p40, %s41, %s42
      %p46 = pneg %p40
      %p47 = scmp.eq.s32.totalorder %s17, 3
      %p48 = por %p46, %p47
      %p49 = scmp.ne.s32.totalorder %s41, %s44
      %p50 = scmp.eq.s32.totalorder %s17, 0
      %p51 = por %p49, %p50
      %p52 = scmp.ne.s32.totalorder %s41, %s44
      %p53 = scmp.eq.s32.totalorder %s22, 3
      %p54 = por %p52, %p53
      %p55 = scmp.ne.s32.totalorder %s44, %s45
      %p56 = scmp.eq.s32.totalorder %s22, 0
      %p57 = por %p55, %p56
      %p58 = scmp.ne.s32.totalorder %s44, %s45
      %p59 = scmp.eq.s32.totalorder %s23, 3
      %p60 = por %p58, %p59
      %p62 = scmp.ne.s32.totalorder %s45, %s61
      %p63 = scmp.eq.s32.totalorder %s23, 0
      %p64 = por %p62, %p63
      %s65 = ssub.s32 %s25, %s32
      %p66 = scmp.eq.s32.totalorder %s65, 0
      %s68 = sadd.s32 %s67, 1
      %s69 = scalar_select %p66, %s67, %s68
      %p72 = pneg %p66
      %p73 = scmp.eq.s32.totalorder %s17, 3
      %p74 = por %p72, %p73
      %p75 = scmp.ne.s32.totalorder %s67, %s70
      %p76 = scmp.eq.s32.totalorder %s17, 0
      %p77 = por %p75, %p76
      %p78 = scmp.ne.s32.totalorder %s67, %s70
      %p79 = scmp.eq.s32.totalorder %s22, 3
      %p80 = por %p78, %p79
      %p81 = scmp.ne.s32.totalorder %s70, %s71
      %p82 = scmp.eq.s32.totalorder %s22, 0
      %p83 = por %p81, %p82
      %p84 = scmp.ne.s32.totalorder %s70, %s71
      %p85 = scmp.eq.s32.totalorder %s23, 3
      %p86 = por %p84, %p85
      %p88 = scmp.ne.s32.totalorder %s71, %s87
      %p89 = scmp.eq.s32.totalorder %s23, 0
      %p90 = por %p88, %p89
      %s91 = ssub.s32 %s24, %s36
      %p92 = scmp.eq.s32.totalorder %s91, 0
      %s94 = sadd.s32 %s93, 1
      %s95 = scalar_select %p92, %s93, %s94
      %p98 = pneg %p92
      %p99 = scmp.eq.s32.totalorder %s17, 3
      %p100 = por %p98, %p99
      %p101 = scmp.ne.s32.totalorder %s93, %s96
      %p102 = scmp.eq.s32.totalorder %s17, 0
      %p103 = por %p101, %p102
      %p104 = scmp.ne.s32.totalorder %s93, %s96
      %p105 = scmp.eq.s32.totalorder %s22, 3
      %p106 = por %p104, %p105
      %p107 = scmp.ne.s32.totalorder %s96, %s97
      %p108 = scmp.eq.s32.totalorder %s22, 0
      %p109 = por %p107, %p108
      %p110 = scmp.ne.s32.totalorder %s96, %s97
      %p111 = scmp.eq.s32.totalorder %s23, 3
      %p112 = por %p110, %p111
      %p114 = scmp.ne.s32.totalorder %s97, %s113
      %p115 = scmp.eq.s32.totalorder %s23, 0
      %p116 = por %p114, %p115
      %p117 = scmp.le.s32.totalorder 1, %s17
      %p118 = scmp.lt.s32.totalorder %s17, 5
      %p119 = pnand %p117, %p118
      %p120 = pneg %p119
      // Predicated region
      $region9: #{tpu_custom_call.1} parent=5 // pred_check
        _
      $region10: #{tpu_custom_call.1} parent=5 // pred_check_branch
        %122 = sbr.rel (%p119) target = $region12
      $region11: #{tpu_custom_call.1} parent=5 // pred_region
        %s123 = ssub.s32 %s17, 1
      $region12: #{tpu_custom_call.1} parent=5 // pred_fallthru
        _
      %p124 = scmp.lt.s32.totalorder %s17, 4
      // Predicated region
      $region13: #{tpu_custom_call.1} parent=5 // pred_check
        %p125 = pneg %p124
      $region14: #{tpu_custom_call.1} parent=5 // pred_check_branch
        %127 = sbr.rel (%p125) target = $region16
      $region15: #{tpu_custom_call.1} parent=5 // pred_region
        // Predicated region
        $region17: #{tpu_custom_call.1} parent=15 // pred_check
          %p128 = pneg %p51
        $region18: #{tpu_custom_call.1} parent=15 // pred_check_branch
          %130 = sbr.rel (%p128) target = $region20
        $region19: #{tpu_custom_call.1} parent=15 // pred_region
          %s131 = sand.u32 %s41, 1
          %s132 = scalar_lea.sflag [#allocation4], %s131
          %s133 = sand.u32 %s41, 1
          %s134 = smul.addr %s133, 32
          %s135 = scalar_lea.vmem [#allocation3], %s134
          %s136 = smul.u32 4, %s24
          %s138 = ssub.s32 512, 512
          %139 = vsyncadd %s132, %s138
          %s140 = smul.addr %s136, 2
          %s141 = sadd.s32 %s25, %s140
          %s142 = smul.addr %s141, 128
          %s143 = scalar_lea.hbm %s0, %s142
          %s144 = sshll.u32 %s135, 4
          %s145 = int_to_ptr.vmem [resolvable:$true] %s144
          %150 = dma.hbm_to_vmem [thread:$0]  %s143, 512, %s145, %s132, 256, 128, 8
        $region20: #{tpu_custom_call.1} parent=15 // pred_fallthru
          _
        // Predicated region
        $region21: #{tpu_custom_call.1} parent=15 // pred_check
          %p151 = pneg %p77
        $region22: #{tpu_custom_call.1} parent=15 // pred_check_branch
          %153 = sbr.rel (%p151) target = $region24
        $region23: #{tpu_custom_call.1} parent=15 // pred_region
          %s154 = sand.u32 %s67, 1
          %s155 = scalar_lea.sflag [#allocation7], %s154
          %s156 = sand.u32 %s67, 1
          %s157 = smul.addr %s156, 64
          %s158 = scalar_lea.vmem [#allocation6], %s157
          %s159 = smul.u32 16, %s25
          %s161 = ssub.s32 1024, 1024
          %162 = vsyncadd %s155, %s161
          %s163 = smul.addr %s159, 64
          %s164 = scalar_lea.hbm %s1, %s163
          %s165 = sshll.u32 %s158, 4
          %s166 = int_to_ptr.vmem [resolvable:$true] %s165
          %171 = dma.hbm_to_vmem [thread:$0]  %s164, 1024, %s166, %s155, 64, 64, 4
        $region24: #{tpu_custom_call.1} parent=15 // pred_fallthru
          _
      $region16: #{tpu_custom_call.1} parent=5 // pred_fallthru
        _
      %p172 = scmp.le.s32.totalorder 1, %s17
      %p173 = scmp.lt.s32.totalorder %s17, 5
      %p174 = pnand %p172, %p173
      %p175 = pneg %p174
      // Predicated region
      $region25: #{tpu_custom_call.1} parent=5 // pred_check
        _
      $region26: #{tpu_custom_call.1} parent=5 // pred_check_branch
        %177 = sbr.rel (%p174) target = $region28
      $region27: #{tpu_custom_call.1} parent=5 // pred_region
        %s178 = ssub.s32 %s17, 1
        %s179 = sand.u32 %s44, 1
        %s180 = scalar_lea.sflag [#allocation4], %s179
        %s181 = sand.u32 %s44, 1
        %s182 = smul.addr %s181, 32
        %s183 = scalar_lea.vmem [#allocation3], %s182
        // Predicated region
        $region29: #{tpu_custom_call.1} parent=27 // pred_check
          %p184 = pneg %p57
        $region30: #{tpu_custom_call.1} parent=27 // pred_check_branch
          %186 = sbr.rel (%p184) target = $region32
        $region31: #{tpu_custom_call.1} parent=27 // pred_region
          %187 = dma.done %s180, 512
        $region32: #{tpu_custom_call.1} parent=27 // pred_fallthru
          _
        %s188 = sand.u32 %s70, 1
        %s189 = scalar_lea.sflag [#allocation7], %s188
        %s190 = sand.u32 %s70, 1
        %s191 = smul.addr %s190, 64
        %s192 = scalar_lea.vmem [#allocation6], %s191
        // Predicated region
        $region33: #{tpu_custom_call.1} parent=27 // pred_check
          %p193 = pneg %p83
        $region34: #{tpu_custom_call.1} parent=27 // pred_check_branch
          %195 = sbr.rel (%p193) target = $region36
        $region35: #{tpu_custom_call.1} parent=27 // pred_region
          %196 = dma.done %s189, 1024
        $region36: #{tpu_custom_call.1} parent=27 // pred_fallthru
          _
        %s197 = sand.u32 %s44, 1
        %s198 = scalar_lea.sflag [#allocation4], %s197
        %s199 = sand.u32 %s44, 1
        %s200 = smul.addr %s199, 32
        %s201 = scalar_lea.vmem [#allocation3], %s200
        %p202 = pneg %p57
        %p203 = pneg %p54
        %s204 = sand.u32 %s70, 1
        %s205 = scalar_lea.sflag [#allocation7], %s204
        %s206 = sand.u32 %s70, 1
        %s207 = smul.addr %s206, 64
        %s208 = scalar_lea.vmem [#allocation6], %s207
        %p209 = pneg %p83
        %p210 = pneg %p80
        %p211 = pneg %p109
        %p212 = pneg %p106
        %s213 = sand.u32 %s96, 1
        %s214 = scalar_lea.sflag [#allocation5], %s213
        %s215 = sand.u32 %s96, 1
        %s216 = smul.addr %s215, 128
        %s217 = scalar_lea.vmem [#allocation8], %s216
        %s218 = smul.u32 4, %s26
        %s219 = smul.u32 16, %s27
        %s220 = smul.u32 16, %s26
        %p222 = scmp.eq.s32.totalorder %s27, 0
        // Predicated region
        $region37: #{tpu_custom_call.1} parent=27 // pred_check
          %p223 = pneg %p222
        $region38: #{tpu_custom_call.1} parent=27 // pred_check_branch
          %225 = sbr.rel (%p223) target = $region40
        $region39: #{tpu_custom_call.1} parent=27 // pred_region
          %226 = vst [vmem:[#allocation2] sm:$0xff] 0.0
          %227 = vst [vmem:[#allocation2 + $0x8] sm:$0xff] 0.0
          %228 = vst [vmem:[#allocation2 + $0x10] sm:$0xff] 0.0
          %229 = vst [vmem:[#allocation2 + $0x18] sm:$0xff] 0.0
          %230 = vst [vmem:[#allocation2 + $0x20] sm:$0xff] 0.0
          %231 = vst [vmem:[#allocation2 + $0x28] sm:$0xff] 0.0
          %232 = vst [vmem:[#allocation2 + $0x30] sm:$0xff] 0.0
          %233 = vst [vmem:[#allocation2 + $0x38] sm:$0xff] 0.0
          %234 = vst [vmem:[#allocation2 + $0x40] sm:$0xff] 0.0
          %235 = vst [vmem:[#allocation2 + $0x48] sm:$0xff] 0.0
          %236 = vst [vmem:[#allocation2 + $0x50] sm:$0xff] 0.0
          %237 = vst [vmem:[#allocation2 + $0x58] sm:$0xff] 0.0
          %238 = vst [vmem:[#allocation2 + $0x60] sm:$0xff] 0.0
          %239 = vst [vmem:[#allocation2 + $0x68] sm:$0xff] 0.0
          %240 = vst [vmem:[#allocation2 + $0x70] sm:$0xff] 0.0
          %241 = vst [vmem:[#allocation2 + $0x78] sm:$0xff] 0.0
        $region40: #{tpu_custom_call.1} parent=27 // pred_fallthru
          _
        %v242 = vld [vmem:[%s183] sm:$0xff]
        %v243 = vld [vmem:[%s183 + $0x8] sm:$0xff]
        %v244 = vld [vmem:[%s183 + $0x10] sm:$0xff]
        %v245 = vld [vmem:[%s183 + $0x18] sm:$0xff]
        %v246 = vunpack.c.l.s8.bf16 %v242
        %v247 = vunpack.c.h.s8.bf16 %v242
        %v248 = vunpack.c.l.s8.bf16 %v243
        %v249 = vunpack.c.h.s8.bf16 %v243
        %v250 = vunpack.c.l.s8.bf16 %v244
        %v251 = vunpack.c.h.s8.bf16 %v244
        %v252 = vunpack.c.l.s8.bf16 %v245
        %v253 = vunpack.c.h.s8.bf16 %v245
        %v254 = vld [vmem:[#allocation2] sm:$0xff]
        %v255 = vld [vmem:[#allocation2 + $0x8] sm:$0xff]
        %v256 = vld [vmem:[#allocation2 + $0x10] sm:$0xff]
        %v257 = vld [vmem:[#allocation2 + $0x18] sm:$0xff]
        %v258 = vld [vmem:[#allocation2 + $0x20] sm:$0xff]
        %v259 = vld [vmem:[#allocation2 + $0x28] sm:$0xff]
        %v260 = vld [vmem:[#allocation2 + $0x30] sm:$0xff]
        %v261 = vld [vmem:[#allocation2 + $0x38] sm:$0xff]
        %v262 = vld [vmem:[#allocation2 + $0x40] sm:$0xff]
        %v263 = vld [vmem:[#allocation2 + $0x48] sm:$0xff]
        %v264 = vld [vmem:[#allocation2 + $0x50] sm:$0xff]
        %v265 = vld [vmem:[#allocation2 + $0x58] sm:$0xff]
        %v266 = vld [vmem:[#allocation2 + $0x60] sm:$0xff]
        %v267 = vld [vmem:[#allocation2 + $0x68] sm:$0xff]
        %v268 = vld [vmem:[#allocation2 + $0x70] sm:$0xff]
        %v269 = vld [vmem:[#allocation2 + $0x78] sm:$0xff]
        %v270 = vld [vmem:[%s192] sm:$0xf]
        %v271 = vld [vmem:[%s192 + $0x4] sm:$0xf]
        %v272 = vld [vmem:[%s192 + $0x8] sm:$0xf]
        %v273 = vld [vmem:[%s192 + $0xc] sm:$0xf]
        %v274 = vld [vmem:[%s192 + $0x10] sm:$0xf]
        %v275 = vld [vmem:[%s192 + $0x14] sm:$0xf]
        %v276 = vld [vmem:[%s192 + $0x18] sm:$0xf]
        %v277 = vld [vmem:[%s192 + $0x1c] sm:$0xf]
        %v278 = vld [vmem:[%s192 + $0x20] sm:$0xf]
        %v279 = vld [vmem:[%s192 + $0x24] sm:$0xf]
        %v280 = vld [vmem:[%s192 + $0x28] sm:$0xf]
        %v281 = vld [vmem:[%s192 + $0x2c] sm:$0xf]
        %v282 = vld [vmem:[%s192 + $0x30] sm:$0xf]
        %v283 = vld [vmem:[%s192 + $0x34] sm:$0xf]
        %v284 = vld [vmem:[%s192 + $0x38] sm:$0xf]
        %v285 = vld [vmem:[%s192 + $0x3c] sm:$0xf]
        %v302 = vunpack.c.l.b16 %v270
        %v303 = vunpack.c.l.b16 %v271
        %v304 = vunpack.c.l.b16 %v272
        %v305 = vunpack.c.l.b16 %v273
        %v306 = vunpack.c.l.b16 %v274
        %v307 = vunpack.c.l.b16 %v275
        %v308 = vunpack.c.l.b16 %v276
        %v309 = vunpack.c.l.b16 %v277
        %v310 = vunpack.c.l.b16 %v278
        %v311 = vunpack.c.l.b16 %v279
        %v312 = vunpack.c.l.b16 %v280
        %v313 = vunpack.c.l.b16 %v281
        %v314 = vunpack.c.l.b16 %v282
        %v315 = vunpack.c.l.b16 %v283
        %v316 = vunpack.c.l.b16 %v284
        %v317 = vunpack.c.l.b16 %v285
        %v318 = vpack.c.b16 %v303, %v302
        %v319 = vpack.c.b16 %v305, %v304
        %v320 = vpack.c.b16 %v307, %v306
        %v321 = vpack.c.b16 %v309, %v308
        %v322 = vpack.c.b16 %v311, %v310
        %v323 = vpack.c.b16 %v313, %v312
        %v324 = vpack.c.b16 %v315, %v314
        %v325 = vpack.c.b16 %v317, %v316
        %334 = vmatprep.subr.bf16.mxu0 0
        %335 = vmatpush1.bf16.msra.mxu0 %v318
        %336 = vmatprep.subr.bf16.mxu0 0
        %337 = vmatpush1.bf16.msra.mxu0 %v319
        %338 = vmatprep.subr.bf16.mxu0 0
        %339 = vmatpush1.bf16.msra.mxu0 %v320
        %340 = vmatprep.subr.bf16.mxu0 0
        %341 = vmatpush1.bf16.msra.mxu0 %v321
        %342 = vmatprep.subr.bf16.mxu0 0
        %343 = vmatpush1.bf16.msra.mxu0 %v322
        %344 = vmatprep.subr.bf16.mxu0 0
        %345 = vmatpush1.bf16.msra.mxu0 %v323
        %346 = vmatprep.subr.bf16.mxu0 0
        %347 = vmatpush1.bf16.msra.mxu0 %v324
        %348 = vmatprep.subr.bf16.mxu0 0
        %349 = vmatpush1.bf16.msra.mxu0 %v325
        %350 = vmatprep.subr.bf16.mxu0 0
        %351 = vmatpush1.bf16.msra.mxu0 0
        %352 = vmatprep.subr.bf16.mxu0 0
        %353 = vmatpush1.bf16.msra.mxu0 0
        %354 = vmatprep.subr.bf16.mxu0 0
        %355 = vmatpush1.bf16.msra.mxu0 0
        %356 = vmatprep.subr.bf16.mxu0 0
        %357 = vmatpush1.bf16.msra.mxu0 0
        %358 = vmatprep.subr.bf16.mxu0 0
        %359 = vmatpush1.bf16.msra.mxu0 0
        %360 = vmatprep.subr.bf16.mxu0 0
        %361 = vmatpush1.bf16.msra.mxu0 0
        %362 = vmatprep.subr.bf16.mxu0 0
        %363 = vmatpush1.bf16.msra.mxu0 0
        %364 = vmatprep.subr.bf16.mxu0 0
        %365 = vmatpush1.bf16.msra.mxu0 0
        %366 = vmatprep.mubr.bf16.mxu0 0
        %367 = vmatmul.mubr.bf16.gmra.mrb[0].mxu0 %v246
        %v368 = vpop.f32.mrb[0].mxu0
        %v369 = vadd.f32 0.0, %v368
        %v370 = vpop.f32.mrb[0].mxu0
        %v371 = vpop.f32.mrb[0].mxu0
        %v372 = vadd.f32 0.0, %v371
        %v373 = vpop.f32.mrb[0].mxu0
        %374 = vmatprep.mubr.bf16.mxu0 0
        %375 = vmatmul.mubr.bf16.gmra.mrb[0].mxu0 %v247
        %v376 = vpop.f32.mrb[0].mxu0
        %v377 = vadd.f32 0.0, %v376
        %v378 = vpop.f32.mrb[0].mxu0
        %v379 = vpop.f32.mrb[0].mxu0
        %v380 = vadd.f32 0.0, %v379
        %v381 = vpop.f32.mrb[0].mxu0
        %382 = vmatprep.mubr.bf16.mxu0 0
        %383 = vmatmul.mubr.bf16.gmra.mrb[0].mxu0 %v248
        %v384 = vpop.f32.mrb[0].mxu0
        %v385 = vadd.f32 0.0, %v384
        %v386 = vpop.f32.mrb[0].mxu0
        %v387 = vpop.f32.mrb[0].mxu0
        %v388 = vadd.f32 0.0, %v387
        %v389 = vpop.f32.mrb[0].mxu0
        %390 = vmatprep.mubr.bf16.mxu0 0
        %391 = vmatmul.mubr.bf16.gmra.mrb[0].mxu0 %v249
        %v392 = vpop.f32.mrb[0].mxu0
        %v393 = vadd.f32 0.0, %v392
        %v394 = vpop.f32.mrb[0].mxu0
        %v395 = vpop.f32.mrb[0].mxu0
        %v396 = vadd.f32 0.0, %v395
        %v397 = vpop.f32.mrb[0].mxu0
        %398 = vmatprep.mubr.bf16.mxu0 0
        %399 = vmatmul.mubr.bf16.gmra.mrb[0].mxu0 %v250
        %v400 = vpop.f32.mrb[0].mxu0
        %v401 = vadd.f32 0.0, %v400
        %v402 = vpop.f32.mrb[0].mxu0
        %v403 = vpop.f32.mrb[0].mxu0
        %v404 = vadd.f32 0.0, %v403
        %v405 = vpop.f32.mrb[0].mxu0
        %406 = vmatprep.mubr.bf16.mxu0 0
        %407 = vmatmul.mubr.bf16.gmra.mrb[0].mxu0 %v251
        %v408 = vpop.f32.mrb[0].mxu0
        %v409 = vadd.f32 0.0, %v408
        %v410 = vpop.f32.mrb[0].mxu0
        %v411 = vpop.f32.mrb[0].mxu0
        %v412 = vadd.f32 0.0, %v411
        %v413 = vpop.f32.mrb[0].mxu0
        %414 = vmatprep.mubr.bf16.mxu0 0
        %415 = vmatmul.mubr.bf16.gmra.mrb[0].mxu0 %v252
        %v416 = vpop.f32.mrb[0].mxu0
        %v417 = vadd.f32 0.0, %v416
        %v418 = vpop.f32.mrb[0].mxu0
        %v419 = vpop.f32.mrb[0].mxu0
        %v420 = vadd.f32 0.0, %v419
        %v421 = vpop.f32.mrb[0].mxu0
        %422 = vmatprep.mubr.bf16.mxu0 0
        %423 = vmatmul.mubr.bf16.gmra.mrb[0].mxu0 %v253
        %v424 = vpop.f32.mrb[0].mxu0
        %v425 = vadd.f32 0.0, %v424
        %v426 = vpop.f32.mrb[0].mxu0
        %v427 = vpop.f32.mrb[0].mxu0
        %v428 = vadd.f32 0.0, %v427
        %v429 = vpop.f32.mrb[0].mxu0
        %430 = vdwg.mxu0
        %v431 = vadd.f32 %v254, %v369
        %v432 = vadd.f32 %v255, %v372
        %v433 = vadd.f32 %v256, %v377
        %v434 = vadd.f32 %v257, %v380
        %v435 = vadd.f32 %v258, %v385
        %v436 = vadd.f32 %v259, %v388
        %v437 = vadd.f32 %v260, %v393
        %v438 = vadd.f32 %v261, %v396
        %v439 = vadd.f32 %v262, %v401
        %v440 = vadd.f32 %v263, %v404
        %v441 = vadd.f32 %v264, %v409
        %v442 = vadd.f32 %v265, %v412
        %v443 = vadd.f32 %v266, %v417
        %v444 = vadd.f32 %v267, %v420
        %v445 = vadd.f32 %v268, %v425
        %v446 = vadd.f32 %v269, %v428
        %447 = vst [vmem:[#allocation2] sm:$0xff] %v431
        %448 = vst [vmem:[#allocation2 + $0x8] sm:$0xff] %v432
        %449 = vst [vmem:[#allocation2 + $0x10] sm:$0xff] %v433
        %450 = vst [vmem:[#allocation2 + $0x18] sm:$0xff] %v434
        %451 = vst [vmem:[#allocation2 + $0x20] sm:$0xff] %v435
        %452 = vst [vmem:[#allocation2 + $0x28] sm:$0xff] %v436
        %453 = vst [vmem:[#allocation2 + $0x30] sm:$0xff] %v437
        %454 = vst [vmem:[#allocation2 + $0x38] sm:$0xff] %v438
        %455 = vst [vmem:[#allocation2 + $0x40] sm:$0xff] %v439
        %456 = vst [vmem:[#allocation2 + $0x48] sm:$0xff] %v440
        %457 = vst [vmem:[#allocation2 + $0x50] sm:$0xff] %v441
        %458 = vst [vmem:[#allocation2 + $0x58] sm:$0xff] %v442
        %459 = vst [vmem:[#allocation2 + $0x60] sm:$0xff] %v443
        %460 = vst [vmem:[#allocation2 + $0x68] sm:$0xff] %v444
        %461 = vst [vmem:[#allocation2 + $0x70] sm:$0xff] %v445
        %462 = vst [vmem:[#allocation2 + $0x78] sm:$0xff] %v446
        %p463 = scmp.eq.s32.totalorder %s27, 1
        // Predicated region
        $region41: #{tpu_custom_call.1} parent=27 // pred_check
          %p464 = pneg %p463
        $region42: #{tpu_custom_call.1} parent=27 // pred_check_branch
          %466 = sbr.rel (%p464) target = $region44
        $region43: #{tpu_custom_call.1} parent=27 // pred_region
          %v467 = vld [vmem:[#allocation2] sm:$0xff]
          %v468 = vld [vmem:[#allocation2 + $0x8] sm:$0xff]
          %v469 = vld [vmem:[#allocation2 + $0x10] sm:$0xff]
          %v470 = vld [vmem:[#allocation2 + $0x18] sm:$0xff]
          %v471 = vld [vmem:[#allocation2 + $0x20] sm:$0xff]
          %v472 = vld [vmem:[#allocation2 + $0x28] sm:$0xff]
          %v473 = vld [vmem:[#allocation2 + $0x30] sm:$0xff]
          %v474 = vld [vmem:[#allocation2 + $0x38] sm:$0xff]
          %v475 = vld [vmem:[#allocation2 + $0x40] sm:$0xff]
          %v476 = vld [vmem:[#allocation2 + $0x48] sm:$0xff]
          %v477 = vld [vmem:[#allocation2 + $0x50] sm:$0xff]
          %v478 = vld [vmem:[#allocation2 + $0x58] sm:$0xff]
          %v479 = vld [vmem:[#allocation2 + $0x60] sm:$0xff]
          %v480 = vld [vmem:[#allocation2 + $0x68] sm:$0xff]
          %v481 = vld [vmem:[#allocation2 + $0x70] sm:$0xff]
          %v482 = vld [vmem:[#allocation2 + $0x78] sm:$0xff]
          %vm483 = vcmp.gt.f32.partialorder %v467, 0.0
          %vm484 = vcmp.gt.f32.partialorder %v468, 0.0
          %vm485 = vcmp.gt.f32.partialorder %v469, 0.0
          %vm486 = vcmp.gt.f32.partialorder %v470, 0.0
          %vm487 = vcmp.gt.f32.partialorder %v471, 0.0
          %vm488 = vcmp.gt.f32.partialorder %v472, 0.0
          %vm489 = vcmp.gt.f32.partialorder %v473, 0.0
          %vm490 = vcmp.gt.f32.partialorder %v474, 0.0
          %vm491 = vcmp.gt.f32.partialorder %v475, 0.0
          %vm492 = vcmp.gt.f32.partialorder %v476, 0.0
          %vm493 = vcmp.gt.f32.partialorder %v477, 0.0
          %vm494 = vcmp.gt.f32.partialorder %v478, 0.0
          %vm495 = vcmp.gt.f32.partialorder %v479, 0.0
          %vm496 = vcmp.gt.f32.partialorder %v480, 0.0
          %vm497 = vcmp.gt.f32.partialorder %v481, 0.0
          %vm498 = vcmp.gt.f32.partialorder %v482, 0.0
          %v499 = vsel %vm483, %v467, 1.0
          %v500 = vsel %vm484, %v468, 1.0
          %v501 = vsel %vm485, %v469, 1.0
          %v502 = vsel %vm486, %v470, 1.0
          %v503 = vsel %vm487, %v471, 1.0
          %v504 = vsel %vm488, %v472, 1.0
          %v505 = vsel %vm489, %v473, 1.0
          %v506 = vsel %vm490, %v474, 1.0
          %v507 = vsel %vm491, %v475, 1.0
          %v508 = vsel %vm492, %v476, 1.0
          %v509 = vsel %vm493, %v477, 1.0
          %v510 = vsel %vm494, %v478, 1.0
          %v511 = vsel %vm495, %v479, 1.0
          %v512 = vsel %vm496, %v480, 1.0
          %v513 = vsel %vm497, %v481, 1.0
          %v514 = vsel %vm498, %v482, 1.0
          %v515 = vrcp.pop %v499
          %v516 = vrcp.pop %v500
          %v517 = vrcp.pop %v501
          %v518 = vrcp.pop %v502
          %v519 = vrcp.pop %v503
          %v520 = vrcp.pop %v504
          %v521 = vrcp.pop %v505
          %v522 = vrcp.pop %v506
          %v523 = vrcp.pop %v507
          %v524 = vrcp.pop %v508
          %v525 = vrcp.pop %v509
          %v526 = vrcp.pop %v510
          %v527 = vrcp.pop %v511
          %v528 = vrcp.pop %v512
          %v529 = vrcp.pop %v513
          %v530 = vrcp.pop %v514
          %532 = vset.pattern.permute.xlu0 32
          %533 = vperm.xlu0 %532, %v515
          %v534 = vpop.permute.xlu0 %533
          %537 = vset.pattern.permute.xlu0 32
          %538 = vperm.xlu0 %537, %v516
          %v539 = vpop.permute.xlu0 %538
          %542 = vset.pattern.permute.xlu0 32
          %543 = vperm.xlu0 %542, %v517
          %v544 = vpop.permute.xlu0 %543
          %547 = vset.pattern.permute.xlu0 32
          %548 = vperm.xlu0 %547, %v518
          %v549 = vpop.permute.xlu0 %548
          %552 = vset.pattern.permute.xlu0 32
          %553 = vperm.xlu0 %552, %v519
          %v554 = vpop.permute.xlu0 %553
          %557 = vset.pattern.permute.xlu0 32
          %558 = vperm.xlu0 %557, %v520
          %v559 = vpop.permute.xlu0 %558
          %562 = vset.pattern.permute.xlu0 32
          %563 = vperm.xlu0 %562, %v521
          %v564 = vpop.permute.xlu0 %563
          %567 = vset.pattern.permute.xlu0 32
          %568 = vperm.xlu0 %567, %v522
          %v569 = vpop.permute.xlu0 %568
          %572 = vset.pattern.permute.xlu0 32
          %573 = vperm.xlu0 %572, %v523
          %v574 = vpop.permute.xlu0 %573
          %577 = vset.pattern.permute.xlu0 32
          %578 = vperm.xlu0 %577, %v524
          %v579 = vpop.permute.xlu0 %578
          %582 = vset.pattern.permute.xlu0 32
          %583 = vperm.xlu0 %582, %v525
          %v584 = vpop.permute.xlu0 %583
          %587 = vset.pattern.permute.xlu0 32
          %588 = vperm.xlu0 %587, %v526
          %v589 = vpop.permute.xlu0 %588
          %592 = vset.pattern.permute.xlu0 32
          %593 = vperm.xlu0 %592, %v527
          %v594 = vpop.permute.xlu0 %593
          %597 = vset.pattern.permute.xlu0 32
          %598 = vperm.xlu0 %597, %v528
          %v599 = vpop.permute.xlu0 %598
          %602 = vset.pattern.permute.xlu0 32
          %603 = vperm.xlu0 %602, %v529
          %v604 = vpop.permute.xlu0 %603
          %607 = vset.pattern.permute.xlu0 32
          %608 = vperm.xlu0 %607, %v530
          %v609 = vpop.permute.xlu0 %608
          %v611 = vmul.f32 %v467, %v534
          %v612 = vmul.f32 %v468, %v539
          %v613 = vmul.f32 %v469, %v544
          %v614 = vmul.f32 %v470, %v549
          %v615 = vmul.f32 %v471, %v554
          %v616 = vmul.f32 %v472, %v559
          %v617 = vmul.f32 %v473, %v564
          %v618 = vmul.f32 %v474, %v569
          %v619 = vmul.f32 %v475, %v574
          %v620 = vmul.f32 %v476, %v579
          %v621 = vmul.f32 %v477, %v584
          %v622 = vmul.f32 %v478, %v589
          %v623 = vmul.f32 %v479, %v594
          %v624 = vmul.f32 %v480, %v599
          %v625 = vmul.f32 %v481, %v604
          %v626 = vmul.f32 %v482, %v609
          %627 = vst [vmem:[%s217] sm:$0xff] %v611
          %628 = vst [vmem:[%s217 + $0x8] sm:$0xff] %v612
          %629 = vst [vmem:[%s217 + $0x10] sm:$0xff] %v613
          %630 = vst [vmem:[%s217 + $0x18] sm:$0xff] %v614
          %631 = vst [vmem:[%s217 + $0x20] sm:$0xff] %v615
          %632 = vst [vmem:[%s217 + $0x28] sm:$0xff] %v616
          %633 = vst [vmem:[%s217 + $0x30] sm:$0xff] %v617
          %634 = vst [vmem:[%s217 + $0x38] sm:$0xff] %v618
          %635 = vst [vmem:[%s217 + $0x40] sm:$0xff] %v619
          %636 = vst [vmem:[%s217 + $0x48] sm:$0xff] %v620
          %637 = vst [vmem:[%s217 + $0x50] sm:$0xff] %v621
          %638 = vst [vmem:[%s217 + $0x58] sm:$0xff] %v622
          %639 = vst [vmem:[%s217 + $0x60] sm:$0xff] %v623
          %640 = vst [vmem:[%s217 + $0x68] sm:$0xff] %v624
          %641 = vst [vmem:[%s217 + $0x70] sm:$0xff] %v625
          %642 = vst [vmem:[%s217 + $0x78] sm:$0xff] %v626
        $region44: #{tpu_custom_call.1} parent=27 // pred_fallthru
          _
        %s643 = sand.u32 %s96, 1
        %s644 = scalar_lea.sflag [#allocation5], %s643
        %s645 = sand.u32 %s96, 1
        %s646 = smul.addr %s645, 128
        %s647 = scalar_lea.vmem [#allocation8], %s646
        // Predicated region
        $region45: #{tpu_custom_call.1} parent=27 // pred_check
          %p648 = pneg %p106
        $region46: #{tpu_custom_call.1} parent=27 // pred_check_branch
          %650 = sbr.rel (%p648) target = $region48
        $region47: #{tpu_custom_call.1} parent=27 // pred_region
          %s651 = smul.u32 16, %s26
          %s653 = ssub.s32 2048, 2048
          %654 = vsyncadd %s644, %s653
          %s655 = smul.addr %s651, 128
          %s656 = scalar_lea.hbm %s2, %s655
          %s657 = sshll.u32 %s647, 4
          %s658 = int_to_ptr.vmem [resolvable:$true] %s657
          %663 = dma.vmem_to_hbm [thread:$0]  %s658, 2048, %s656, %s644, 128, 128, 8
        $region48: #{tpu_custom_call.1} parent=27 // pred_fallthru
          _
      $region28: #{tpu_custom_call.1} parent=5 // pred_fallthru
        _
      %p664 = scmp.le.s32.totalorder 2, %s17
      // Predicated region
      $region49: #{tpu_custom_call.1} parent=5 // pred_check
        %p665 = pneg %p664
      $region50: #{tpu_custom_call.1} parent=5 // pred_check_branch
        %667 = sbr.rel (%p665) target = $region52
      $region51: #{tpu_custom_call.1} parent=5 // pred_region
        %s668 = ssub.s32 %s17, 2
        // Predicated region
        $region53: #{tpu_custom_call.1} parent=51 // pred_check
          %p669 = pneg %p112
        $region54: #{tpu_custom_call.1} parent=51 // pred_check_branch
          %671 = sbr.rel (%p669) target = $region56
        $region55: #{tpu_custom_call.1} parent=51 // pred_region
          %s672 = sand.u32 %s97, 1
          %s673 = scalar_lea.sflag [#allocation5], %s672
          %s674 = sand.u32 %s97, 1
          %s675 = smul.addr %s674, 128
          %s676 = scalar_lea.vmem [#allocation8], %s675
          %677 = dma.done %s673, 2048
        $region56: #{tpu_custom_call.1} parent=51 // pred_fallthru
          _
      $region52: #{tpu_custom_call.1} parent=5 // pred_fallthru
        _
    $region6: #{tpu_custom_call.1} parent=1 // loop_footer
      %s21 = sadd.s32 1, %s17
    $region7: #{tpu_custom_call.1} parent=1 // loop_footer_branch
      %16 = sbr.rel target = $region3
    $region8: #{tpu_custom_call.1} parent=1 // loop_exit
      _
    %678 = vsyncpa [#allocation4], 1
    %s679 = scalar_lea.sflag [#allocation4], 1
    %680 = vsyncpa %s679, 1
    %681 = vsyncpa [#allocation7], 1
    %s682 = scalar_lea.sflag [#allocation7], 1
    %683 = vsyncpa %s682, 1
    %684 = vsyncpa [#allocation5], 1
    %s685 = scalar_lea.sflag [#allocation5], 1
    %686 = vsyncpa %s685, 1

</llo_original>
